<compile_context>
chip_gen: v7x
topology: tpu7x:2x2x1
jax: 0.10.0
libtpu: 0.0.40
codegen_flags: <defaults>
</compile_context>

<pallas_src>
import functools

import jax
import jax.numpy as jnp
from jax.experimental import pallas as pl
from jax.experimental.pallas import tpu as pltpu

_VMEM_LIMIT = 48 * 1024 * 1024  # safe on v5e/v6e (128 MiB) and below v7x's 64 MiB


def _pick_block(n, candidates=(512, 256, 128)):
    """Largest candidate that divides n, else fall back to the full length."""
    for c in candidates:
        if n >= c and n % c == 0:
            return c
    return n


def _invariant_spec(block_shape):
    """BlockSpec for a grid-invariant operand, single-buffered when supported."""
    zeros = (0,) * len(block_shape)
    index_map = lambda *_: zeros
    try:
        return pl.BlockSpec(block_shape, index_map, pipeline_mode=pl.Buffered(1))
    except Exception:  # older jax: no pipeline_mode / pl.Buffered
        return pl.BlockSpec(block_shape, index_map)


# --------------------------------------------------------------------------- #
# Kernel 1: LayerNorm + QKV projection (computed once per token)
# --------------------------------------------------------------------------- #
def _qkv_proj_kernel(x_ref, gamma_ref, beta_ref, wq_ref, wk_ref, wv_ref,
                     q_ref, k_ref, v_ref, *, heads, eps, compute_dtype):
    x = x_ref[0].astype(jnp.float32)                        # (bn, D)
    mean = jnp.mean(x, axis=-1, keepdims=True)
    var = jnp.mean(jnp.square(x - mean), axis=-1, keepdims=True)
    xn = ((x - mean) * jax.lax.rsqrt(var + eps)) * gamma_ref[...] + beta_ref[...]
    xn = xn.astype(compute_dtype)                           # (bn, D)

    # Unrolled per-head matmuls written straight into the destination blocks:
    # no (heads, rows, D) broadcast, no transpose.  Scale is folded into Wq.
    for h in range(heads):
        q_ref[0, h] = jnp.dot(xn, wq_ref[h],
                              preferred_element_type=jnp.float32).astype(q_ref.dtype)
        k_ref[0, h] = jnp.dot(xn, wk_ref[h],
                              preferred_element_type=jnp.float32).astype(k_ref.dtype)
        v_ref[0, h] = jnp.dot(xn, wv_ref[h],
                              preferred_element_type=jnp.float32).astype(v_ref.dtype)


# --------------------------------------------------------------------------- #
# Kernel 2: flash attention + fused per-head output projection
#   grid = (B, q_blocks, heads, kv_blocks); heads & kv are "arbitrary" axes.
# --------------------------------------------------------------------------- #
def _flash_attn_kernel(q_ref, k_ref, v_ref, wo_ref, bo_ref, o_ref,
                       m_scr, l_scr, acc_scr, out_scr,
                       *, compute_dtype, exp_dtype, approx_recip):
    h = pl.program_id(2)
    ki = pl.program_id(3)
    nh = pl.num_programs(2)
    nk = pl.num_programs(3)

    # Per-(batch, q-block) init: start the fused output accumulator at the bias.
    @pl.when(jnp.logical_and(h == 0, ki == 0))
    def _init_out():
        out_scr[...] = jnp.broadcast_to(bo_ref[...], out_scr.shape)

    # Per-head init of the online-softmax state.
    @pl.when(ki == 0)
    def _init_head():
        m_scr[...] = jnp.full_like(m_scr, -jnp.inf)
        l_scr[...] = jnp.zeros_like(l_scr)
        acc_scr[...] = jnp.zeros_like(acc_scr)

    q = q_ref[0, 0]                                          # (bq,  dh) compute dtype
    k = k_ref[0, 0]                                          # (bkv, dh)
    v = v_ref[0, 0]                                          # (bkv, dh)

    # Scores (scale already folded into Wq).
    s = jax.lax.dot_general(q, k, (((1,), (1,)), ((), ())),
                            preferred_element_type=jnp.float32)  # (bq, bkv) f32

    m_prev = m_scr[...]
    m_new = jnp.maximum(m_prev, jnp.max(s, axis=-1, keepdims=True))
    alpha = jnp.exp(m_prev - m_new)
    # exp in the compute dtype (bf16 on v6e/v7x frees the EUP); stats stay f32.
    p = jnp.exp((s - m_new).astype(exp_dtype))
    l_scr[...] = alpha * l_scr[...] + jnp.sum(p.astype(jnp.float32), axis=-1,
                                              keepdims=True)
    acc_scr[...] = alpha * acc_scr[...] + jnp.dot(
        p.astype(compute_dtype), v, preferred_element_type=jnp.float32)
    m_scr[...] = m_new

    # Finalize this head: normalize and fuse the output projection + head-sum.
    @pl.when(ki == nk - 1)
    def _head_done():
        inv_l = pl.reciprocal(l_scr[...], approx=approx_recip)
        o_h = (acc_scr[...] * inv_l).astype(compute_dtype)   # (bq, dh)
        out_scr[...] += jnp.dot(o_h, wo_ref[0],
                                preferred_element_type=jnp.float32)  # (bq, D)

    @pl.when(jnp.logical_and(h == nh - 1, ki == nk - 1))
    def _write():
        o_ref[0] = out_scr[...].astype(o_ref.dtype)


# --------------------------------------------------------------------------- #
# Wrapper
# --------------------------------------------------------------------------- #
def attention_pallas(x, gamma, beta, w_qkv, w_out, b_out, *, heads, dim_head,
                     compute_dtype=jnp.bfloat16, exp_dtype=None,
                     block_q=None, block_kv=None, eps=1e-5):
    """x: (B, N, D). w_qkv: (D, 3*inner), w_out: (inner, D) stored (in, out)."""
    B, N, D = x.shape
    inner = heads * dim_head
    assert w_qkv.shape == (D, 3 * inner) and w_out.shape == (inner, D)
    scale = float(dim_head) ** -0.5
    if exp_dtype is None:
        exp_dtype = compute_dtype          # pass jnp.float32 on v5e (no bf16 EUP)
    approx_recip = jnp.dtype(compute_dtype) == jnp.dtype(jnp.bfloat16)

    # ---- host-side weight prep (exact, once) ---------------------------------
    w_q, w_k, w_v = jnp.split(w_qkv, 3, axis=-1)             # (D, inner) each

    def per_head(w):                                          # -> (h, D, dh)
        return jnp.transpose(w.reshape(D, heads, dim_head), (1, 0, 2))

    w_qh = (per_head(w_q) * scale).astype(compute_dtype)      # fold softmax scale
    w_kh = per_head(w_k).astype(compute_dtype)
    w_vh = per_head(w_v).astype(compute_dtype)
    w_oh = w_out.reshape(heads, dim_head, D).astype(compute_dtype)   # (h, dh, D)
    gamma2 = gamma.reshape(1, D).astype(jnp.float32)
    beta2 = beta.reshape(1, D).astype(jnp.float32)
    bo2 = b_out.reshape(1, D).astype(jnp.float32)

    bq = block_q or _pick_block(N)
    bkv = block_kv or _pick_block(N)
    bn = bq
    assert N % bq == 0 and N % bkv == 0 and N % bn == 0

    # ---- kernel 1: LayerNorm + QKV projection (once per token) ---------------
    proj_kernel = functools.partial(_qkv_proj_kernel, heads=heads, eps=eps,
                                    compute_dtype=compute_dtype)
    qkv_shape = jax.ShapeDtypeStruct((B, heads, N, dim_head), compute_dtype)
    q, k, v = pl.pallas_call(
        proj_kernel,
        out_shape=(qkv_shape, qkv_shape, qkv_shape),
        grid_spec=pltpu.PrefetchScalarGridSpec(
            num_scalar_prefetch=0,
            grid=(B, N // bn),
            in_specs=[
                pl.BlockSpec((1, bn, D), lambda b, i: (b, i, 0)),      # x block
                _invariant_spec((1, D)),                               # gamma
                _invariant_spec((1, D)),                               # beta
                _invariant_spec((heads, D, dim_head)),                 # Wq * scale
                _invariant_spec((heads, D, dim_head)),                 # Wk
                _invariant_spec((heads, D, dim_head)),                 # Wv
            ],
            out_specs=[
                pl.BlockSpec((1, heads, bn, dim_head), lambda b, i: (b, 0, i, 0)),
                pl.BlockSpec((1, heads, bn, dim_head), lambda b, i: (b, 0, i, 0)),
                pl.BlockSpec((1, heads, bn, dim_head), lambda b, i: (b, 0, i, 0)),
            ]),
        compiler_params=pltpu.CompilerParams(
            dimension_semantics=("parallel", "parallel"),
            vmem_limit_bytes=_VMEM_LIMIT),
    )(x, gamma2, beta2, w_qh, w_kh, w_vh)

    # ---- kernel 2: flash attention + fused output projection -----------------
    flash_kernel = functools.partial(_flash_attn_kernel,
                                     compute_dtype=compute_dtype,
                                     exp_dtype=exp_dtype,
                                     approx_recip=approx_recip)
    out = pl.pallas_call(
        flash_kernel,
        out_shape=jax.ShapeDtypeStruct((B, N, D), x.dtype),
        grid_spec=pltpu.PrefetchScalarGridSpec(
            num_scalar_prefetch=0,
            grid=(B, N // bq, heads, N // bkv),
            in_specs=[
                pl.BlockSpec((1, 1, bq, dim_head),
                             lambda b, qi, h, ki: (b, h, qi, 0)),      # Q (resident over kv)
                pl.BlockSpec((1, 1, bkv, dim_head),
                             lambda b, qi, h, ki: (b, h, ki, 0)),      # K stream
                pl.BlockSpec((1, 1, bkv, dim_head),
                             lambda b, qi, h, ki: (b, h, ki, 0)),      # V stream
                pl.BlockSpec((1, dim_head, D),
                             lambda b, qi, h, ki: (h, 0, 0)),          # Wo for this head
                _invariant_spec((1, D)),                               # output bias
            ],
            out_specs=pl.BlockSpec((1, bq, D), lambda b, qi, h, ki: (b, qi, 0)),
            scratch_shapes=[
                pltpu.VMEM((bq, 1), jnp.float32),         # running max
                pltpu.VMEM((bq, 1), jnp.float32),         # running denominator
                pltpu.VMEM((bq, dim_head), jnp.float32),  # per-head attention acc
                pltpu.VMEM((bq, D), jnp.float32),         # fused output acc (all heads)
            ]),
        compiler_params=pltpu.CompilerParams(
            dimension_semantics=("parallel", "parallel", "arbitrary", "arbitrary"),
            vmem_limit_bytes=_VMEM_LIMIT),
    )(q, k, v, w_oh, bo2)
    return out


# --------------------------------------------------------------------------- #
# Pure-JAX reference mirroring the PyTorch forward (f32)
# --------------------------------------------------------------------------- #
def attention_reference(x, gamma, beta, w_qkv, w_out, b_out, *, heads, dim_head):
    B, N, D = x.shape
    inner = heads * dim_head
    scale = float(dim_head) ** -0.5

    mean = jnp.mean(x, axis=-1, keepdims=True)
    var = jnp.mean((x - mean) ** 2, axis=-1, keepdims=True)
    xn = (x - mean) / jnp.sqrt(var + 1e-5) * gamma + beta

    qkv = xn @ w_qkv
    q, k, v = jnp.split(qkv, 3, axis=-1)

    def split_heads(t):  # 'b n (h d) -> b h n d'
        return t.reshape(B, N, heads, dim_head).transpose(0, 2, 1, 3)

    q, k, v = map(split_heads, (q, k, v))
    dots = jnp.einsum("bhnd,bhmd->bhnm", q, k) * scale
    attn = jax.nn.softmax(dots, axis=-1)
    out = jnp.einsum("bhnm,bhmd->bhnd", attn, v)
    out = out.transpose(0, 2, 1, 3).reshape(B, N, inner)
    return out @ w_out + b_out


if __name__ == "__main__":
    def run_case(B, N, D, heads, dim_head, block_q=None, block_kv=None):
        inner = heads * dim_head
        key = jax.random.PRNGKey(0)
        kx, kg, kbt, kq, ko, kb = jax.random.split(key, 6)
        x = jax.random.normal(kx, (B, N, D), dtype=jnp.float32)
        gamma = 1.0 + 0.1 * jax.random.normal(kg, (D,), dtype=jnp.float32)
        beta = 0.05 * jax.random.normal(kbt, (D,), dtype=jnp.float32)
        w_qkv = 0.05 * jax.random.normal(kq, (D, 3 * inner), dtype=jnp.float32)
        w_out = 0.05 * jax.random.normal(ko, (inner, D), dtype=jnp.float32)
        b_out = 0.01 * jax.random.normal(kb, (D,), dtype=jnp.float32)

        ref = attention_reference(x, gamma, beta, w_qkv, w_out, b_out,
                                  heads=heads, dim_head=dim_head)

        # Optimized bf16-operand path (recommended configuration).
        out_bf16 = attention_pallas(x, gamma, beta, w_qkv, w_out, b_out,
                                    heads=heads, dim_head=dim_head,
                                    compute_dtype=jnp.bfloat16,
                                    block_q=block_q, block_kv=block_kv)
        out_bf16 = jax.block_until_ready(out_bf16)
        assert out_bf16.shape == (B, N, D)
        assert jnp.allclose(out_bf16, ref, atol=2e-2, rtol=2e-2), "bf16 mismatch"

        # Full-f32 operand path (tighter numerical check of the same kernels).
        out_f32 = attention_pallas(x, gamma, beta, w_qkv, w_out, b_out,
                                   heads=heads, dim_head=dim_head,
                                   compute_dtype=jnp.float32,
                                   block_q=block_q, block_kv=block_kv)
        out_f32 = jax.block_until_ready(out_f32)
        assert jnp.allclose(out_f32, ref, atol=5e-3, rtol=5e-3), "f32 mismatch"

    # Small shape consistent with the module (batch=2, seq=8, hidden=32).
    run_case(B=2, N=8, D=32, heads=2, dim_head=16)
    # Multi-block shape exercising the flash accumulation / tiling path.
    run_case(B=2, N=256, D=128, heads=4, dim_head=32, block_q=128, block_kv=128)

    print("KERNEL_OK")
</pallas_src>

<mosaic_0001>
module attributes {stable_mosaic.version = 11 : i64} {
  func.func @_qkv_proj_kernel(%arg0: i32, %arg1: i32, %arg2: memref<1x8x32xf32, #tpu.memory_space<vmem>>, %arg3: memref<1x32xf32, #tpu.memory_space<vmem>>, %arg4: memref<1x32xf32, #tpu.memory_space<vmem>>, %arg5: memref<2x32x16xbf16, #tpu.memory_space<vmem>>, %arg6: memref<2x32x16xbf16, #tpu.memory_space<vmem>>, %arg7: memref<2x32x16xbf16, #tpu.memory_space<vmem>>, %arg8: memref<1x2x8x16xbf16, #tpu.memory_space<vmem>>, %arg9: memref<1x2x8x16xbf16, #tpu.memory_space<vmem>>, %arg10: memref<1x2x8x16xbf16, #tpu.memory_space<vmem>>) attributes {dimension_semantics = [#tpu.dimension_semantics<parallel>, #tpu.dimension_semantics<parallel>], iteration_bounds = array<i64: 2, 1>, scalar_prefetch = 0 : i64, scratch_operands = 0 : i64, tpu.core_type = #tpu.core_type<tc>, window_params = [{transform_indices = @transform_0, window_bounds = array<i64: 1, 8, 32>}, {pipeline_mode = #tpu.pipeline_mode<synchronous>, transform_indices = @transform_1, window_bounds = array<i64: 1, 32>}, {pipeline_mode = #tpu.pipeline_mode<synchronous>, transform_indices = @transform_2, window_bounds = array<i64: 1, 32>}, {pipeline_mode = #tpu.pipeline_mode<synchronous>, transform_indices = @transform_3, window_bounds = array<i64: 2, 32, 16>}, {pipeline_mode = #tpu.pipeline_mode<synchronous>, transform_indices = @transform_4, window_bounds = array<i64: 2, 32, 16>}, {pipeline_mode = #tpu.pipeline_mode<synchronous>, transform_indices = @transform_5, window_bounds = array<i64: 2, 32, 16>}, {transform_indices = @transform_6, window_bounds = array<i64: 1, 2, 8, 16>}, {transform_indices = @transform_7, window_bounds = array<i64: 1, 2, 8, 16>}, {transform_indices = @transform_8, window_bounds = array<i64: 1, 2, 8, 16>}]} {
    %c0 = arith.constant 0 : index
    %c0_0 = arith.constant 0 : index
    %c0_1 = arith.constant 0 : index
    %0 = vector.load %arg2[%c0, %c0_0, %c0_1] : memref<1x8x32xf32, #tpu.memory_space<vmem>>, vector<1x8x32xf32>
    %1 = vector.shape_cast %0 : vector<1x8x32xf32> to vector<8x32xf32>
    %cst = arith.constant dense<0.000000e+00> : vector<8xf32>
    %2 = vector.multi_reduction <add>, %1, %cst [1] : vector<8x32xf32> to vector<8xf32>
    %3 = vector.shape_cast %2 : vector<8xf32> to vector<8x1xf32>
    %cst_2 = arith.constant 3.200000e+01 : f32
    %4 = vector.broadcast %cst_2 : f32 to vector<8x1xf32>
    %5 = arith.divf %3, %4 : vector<8x1xf32>
    %6 = vector.broadcast %5 : vector<8x1xf32> to vector<8x32xf32>
    %7 = arith.subf %1, %6 : vector<8x32xf32>
    %8 = arith.mulf %7, %7 : vector<8x32xf32>
    %cst_3 = arith.constant dense<0.000000e+00> : vector<8xf32>
    %9 = vector.multi_reduction <add>, %8, %cst_3 [1] : vector<8x32xf32> to vector<8xf32>
    %10 = vector.shape_cast %9 : vector<8xf32> to vector<8x1xf32>
    %cst_4 = arith.constant 3.200000e+01 : f32
    %11 = vector.broadcast %cst_4 : f32 to vector<8x1xf32>
    %12 = arith.divf %10, %11 : vector<8x1xf32>
    %13 = vector.broadcast %5 : vector<8x1xf32> to vector<8x32xf32>
    %14 = arith.subf %1, %13 : vector<8x32xf32>
    %cst_5 = arith.constant 9.99999974E-6 : f32
    %15 = vector.broadcast %cst_5 : f32 to vector<8x1xf32>
    %16 = arith.addf %12, %15 : vector<8x1xf32>
    %17 = math.rsqrt %16 : vector<8x1xf32>
    %18 = vector.broadcast %17 : vector<8x1xf32> to vector<8x32xf32>
    %19 = arith.mulf %14, %18 : vector<8x32xf32>
    %c0_6 = arith.constant 0 : index
    %c0_7 = arith.constant 0 : index
    %20 = vector.load %arg3[%c0_6, %c0_7] : memref<1x32xf32, #tpu.memory_space<vmem>>, vector<1x32xf32>
    %21 = vector.broadcast %20 : vector<1x32xf32> to vector<8x32xf32>
    %22 = arith.mulf %19, %21 : vector<8x32xf32>
    %c0_8 = arith.constant 0 : index
    %c0_9 = arith.constant 0 : index
    %23 = vector.load %arg4[%c0_8, %c0_9] : memref<1x32xf32, #tpu.memory_space<vmem>>, vector<1x32xf32>
    %24 = vector.broadcast %23 : vector<1x32xf32> to vector<8x32xf32>
    %25 = arith.addf %22, %24 : vector<8x32xf32>
    %26 = arith.truncf %25 : vector<8x32xf32> to vector<8x32xbf16>
    %c0_10 = arith.constant 0 : index
    %c0_11 = arith.constant 0 : index
    %c0_12 = arith.constant 0 : index
    %27 = vector.load %arg5[%c0_10, %c0_11, %c0_12] : memref<2x32x16xbf16, #tpu.memory_space<vmem>>, vector<1x32x16xbf16>
    %28 = vector.shape_cast %27 : vector<1x32x16xbf16> to vector<32x16xbf16>
    %cst_13 = arith.constant dense<0.000000e+00> : vector<8x16xf32>
    %29 = tpu.matmul %26, %28, %cst_13 {dimension_numbers = #tpu.dot_dimension_numbers<[1], [0], [0], [1], [0, 0, 1, 1], [], []>} : vector<8x32xbf16>, vector<32x16xbf16>, vector<8x16xf32> -> vector<8x16xf32>
    %30 = arith.truncf %29 : vector<8x16xf32> to vector<8x16xbf16>
    %c0_14 = arith.constant 0 : index
    %c0_15 = arith.constant 0 : index
    %c0_16 = arith.constant 0 : index
    %c0_17 = arith.constant 0 : index
    %31 = vector.load %arg8[%c0_14, %c0_15, %c0_16, %c0_17] : memref<1x2x8x16xbf16, #tpu.memory_space<vmem>>, vector<1x1x8x16xbf16>
    %32 = vector.shape_cast %31 : vector<1x1x8x16xbf16> to vector<8x16xbf16>
    %33 = vector.shape_cast %30 : vector<8x16xbf16> to vector<1x1x8x16xbf16>
    tpu.vector_store %arg8[%c0_14, %c0_15, %c0_16, %c0_17], %33 {strides = array<i32>} : memref<1x2x8x16xbf16, #tpu.memory_space<vmem>>, vector<1x1x8x16xbf16>,
    %c0_18 = arith.constant 0 : index
    %c0_19 = arith.constant 0 : index
    %c0_20 = arith.constant 0 : index
    %34 = vector.load %arg6[%c0_18, %c0_19, %c0_20] : memref<2x32x16xbf16, #tpu.memory_space<vmem>>, vector<1x32x16xbf16>
    %35 = vector.shape_cast %34 : vector<1x32x16xbf16> to vector<32x16xbf16>
    %cst_21 = arith.constant dense<0.000000e+00> : vector<8x16xf32>
    %36 = tpu.matmul %26, %35, %cst_21 {dimension_numbers = #tpu.dot_dimension_numbers<[1], [0], [0], [1], [0, 0, 1, 1], [], []>} : vector<8x32xbf16>, vector<32x16xbf16>, vector<8x16xf32> -> vector<8x16xf32>
    %37 = arith.truncf %36 : vector<8x16xf32> to vector<8x16xbf16>
    %c0_22 = arith.constant 0 : index
    %c0_23 = arith.constant 0 : index
    %c0_24 = arith.constant 0 : index
    %c0_25 = arith.constant 0 : index
    %38 = vector.load %arg9[%c0_22, %c0_23, %c0_24, %c0_25] : memref<1x2x8x16xbf16, #tpu.memory_space<vmem>>, vector<1x1x8x16xbf16>
    %39 = vector.shape_cast %38 : vector<1x1x8x16xbf16> to vector<8x16xbf16>
    %40 = vector.shape_cast %37 : vector<8x16xbf16> to vector<1x1x8x16xbf16>
    tpu.vector_store %arg9[%c0_22, %c0_23, %c0_24, %c0_25], %40 {strides = array<i32>} : memref<1x2x8x16xbf16, #tpu.memory_space<vmem>>, vector<1x1x8x16xbf16>,
    %c0_26 = arith.constant 0 : index
    %c0_27 = arith.constant 0 : index
    %c0_28 = arith.constant 0 : index
    %41 = vector.load %arg7[%c0_26, %c0_27, %c0_28] : memref<2x32x16xbf16, #tpu.memory_space<vmem>>, vector<1x32x16xbf16>
    %42 = vector.shape_cast %41 : vector<1x32x16xbf16> to vector<32x16xbf16>
    %cst_29 = arith.constant dense<0.000000e+00> : vector<8x16xf32>
    %43 = tpu.matmul %26, %42, %cst_29 {dimension_numbers = #tpu.dot_dimension_numbers<[1], [0], [0], [1], [0, 0, 1, 1], [], []>} : vector<8x32xbf16>, vector<32x16xbf16>, vector<8x16xf32> -> vector<8x16xf32>
    %44 = arith.truncf %43 : vector<8x16xf32> to vector<8x16xbf16>
    %c0_30 = arith.constant 0 : index
    %c0_31 = arith.constant 0 : index
    %c0_32 = arith.constant 0 : index
    %c0_33 = arith.constant 0 : index
    %45 = vector.load %arg10[%c0_30, %c0_31, %c0_32, %c0_33] : memref<1x2x8x16xbf16, #tpu.memory_space<vmem>>, vector<1x1x8x16xbf16>
    %46 = vector.shape_cast %45 : vector<1x1x8x16xbf16> to vector<8x16xbf16>
    %47 = vector.shape_cast %44 : vector<8x16xbf16> to vector<1x1x8x16xbf16>
    tpu.vector_store %arg10[%c0_30, %c0_31, %c0_32, %c0_33], %47 {strides = array<i32>} : memref<1x2x8x16xbf16, #tpu.memory_space<vmem>>, vector<1x1x8x16xbf16>,
    %c1 = arith.constant 1 : index
    %c0_34 = arith.constant 0 : index
    %c0_35 = arith.constant 0 : index
    %48 = vector.load %arg5[%c1, %c0_34, %c0_35] : memref<2x32x16xbf16, #tpu.memory_space<vmem>>, vector<1x32x16xbf16>
    %49 = vector.shape_cast %48 : vector<1x32x16xbf16> to vector<32x16xbf16>
    %cst_36 = arith.constant dense<0.000000e+00> : vector<8x16xf32>
    %50 = tpu.matmul %26, %49, %cst_36 {dimension_numbers = #tpu.dot_dimension_numbers<[1], [0], [0], [1], [0, 0, 1, 1], [], []>} : vector<8x32xbf16>, vector<32x16xbf16>, vector<8x16xf32> -> vector<8x16xf32>
    %51 = arith.truncf %50 : vector<8x16xf32> to vector<8x16xbf16>
    %c0_37 = arith.constant 0 : index
    %c1_38 = arith.constant 1 : index
    %c0_39 = arith.constant 0 : index
    %c0_40 = arith.constant 0 : index
    %52 = vector.load %arg8[%c0_37, %c1_38, %c0_39, %c0_40] : memref<1x2x8x16xbf16, #tpu.memory_space<vmem>>, vector<1x1x8x16xbf16>
    %53 = vector.shape_cast %52 : vector<1x1x8x16xbf16> to vector<8x16xbf16>
    %54 = vector.shape_cast %51 : vector<8x16xbf16> to vector<1x1x8x16xbf16>
    tpu.vector_store %arg8[%c0_37, %c1_38, %c0_39, %c0_40], %54 {strides = array<i32>} : memref<1x2x8x16xbf16, #tpu.memory_space<vmem>>, vector<1x1x8x16xbf16>,
    %c1_41 = arith.constant 1 : index
    %c0_42 = arith.constant 0 : index
    %c0_43 = arith.constant 0 : index
    %55 = vector.load %arg6[%c1_41, %c0_42, %c0_43] : memref<2x32x16xbf16, #tpu.memory_space<vmem>>, vector<1x32x16xbf16>
    %56 = vector.shape_cast %55 : vector<1x32x16xbf16> to vector<32x16xbf16>
    %cst_44 = arith.constant dense<0.000000e+00> : vector<8x16xf32>
    %57 = tpu.matmul %26, %56, %cst_44 {dimension_numbers = #tpu.dot_dimension_numbers<[1], [0], [0], [1], [0, 0, 1, 1], [], []>} : vector<8x32xbf16>, vector<32x16xbf16>, vector<8x16xf32> -> vector<8x16xf32>
    %58 = arith.truncf %57 : vector<8x16xf32> to vector<8x16xbf16>
    %c0_45 = arith.constant 0 : index
    %c1_46 = arith.constant 1 : index
    %c0_47 = arith.constant 0 : index
    %c0_48 = arith.constant 0 : index
    %59 = vector.load %arg9[%c0_45, %c1_46, %c0_47, %c0_48] : memref<1x2x8x16xbf16, #tpu.memory_space<vmem>>, vector<1x1x8x16xbf16>
    %60 = vector.shape_cast %59 : vector<1x1x8x16xbf16> to vector<8x16xbf16>
    %61 = vector.shape_cast %58 : vector<8x16xbf16> to vector<1x1x8x16xbf16>
    tpu.vector_store %arg9[%c0_45, %c1_46, %c0_47, %c0_48], %61 {strides = array<i32>} : memref<1x2x8x16xbf16, #tpu.memory_space<vmem>>, vector<1x1x8x16xbf16>,
    %c1_49 = arith.constant 1 : index
    %c0_50 = arith.constant 0 : index
    %c0_51 = arith.constant 0 : index
    %62 = vector.load %arg7[%c1_49, %c0_50, %c0_51] : memref<2x32x16xbf16, #tpu.memory_space<vmem>>, vector<1x32x16xbf16>
    %63 = vector.shape_cast %62 : vector<1x32x16xbf16> to vector<32x16xbf16>
    %cst_52 = arith.constant dense<0.000000e+00> : vector<8x16xf32>
    %64 = tpu.matmul %26, %63, %cst_52 {dimension_numbers = #tpu.dot_dimension_numbers<[1], [0], [0], [1], [0, 0, 1, 1], [], []>} : vector<8x32xbf16>, vector<32x16xbf16>, vector<8x16xf32> -> vector<8x16xf32>
    %65 = arith.truncf %64 : vector<8x16xf32> to vector<8x16xbf16>
    %c0_53 = arith.constant 0 : index
    %c1_54 = arith.constant 1 : index
    %c0_55 = arith.constant 0 : index
    %c0_56 = arith.constant 0 : index
    %66 = vector.load %arg10[%c0_53, %c1_54, %c0_55, %c0_56] : memref<1x2x8x16xbf16, #tpu.memory_space<vmem>>, vector<1x1x8x16xbf16>
    %67 = vector.shape_cast %66 : vector<1x1x8x16xbf16> to vector<8x16xbf16>
    %68 = vector.shape_cast %65 : vector<8x16xbf16> to vector<1x1x8x16xbf16>
    tpu.vector_store %arg10[%c0_53, %c1_54, %c0_55, %c0_56], %68 {strides = array<i32>} : memref<1x2x8x16xbf16, #tpu.memory_space<vmem>>, vector<1x1x8x16xbf16>,
    return
  }
  func.func @transform_0(%arg0: i32, %arg1: i32) -> (i32, i32, i32) {
    %c0_i32 = arith.constant 0 : i32
    %c0_i32_0 = arith.constant 0 : i32
    return %arg0, %arg1, %c0_i32 : i32, i32, i32
  }
  func.func @transform_1(%arg0: i32, %arg1: i32) -> (i32, i32) {
    %c0_i32 = arith.constant 0 : i32
    %c0_i32_0 = arith.constant 0 : i32
    %c0_i32_1 = arith.constant 0 : i32
    return %c0_i32, %c0_i32_0 : i32, i32
  }
  func.func @transform_2(%arg0: i32, %arg1: i32) -> (i32, i32) {
    %c0_i32 = arith.constant 0 : i32
    %c0_i32_0 = arith.constant 0 : i32
    %c0_i32_1 = arith.constant 0 : i32
    return %c0_i32, %c0_i32_0 : i32, i32
  }
  func.func @transform_3(%arg0: i32, %arg1: i32) -> (i32, i32, i32) {
    %c0_i32 = arith.constant 0 : i32
    %c0_i32_0 = arith.constant 0 : i32
    %c0_i32_1 = arith.constant 0 : i32
    %c0_i32_2 = arith.constant 0 : i32
    return %c0_i32, %c0_i32_0, %c0_i32_1 : i32, i32, i32
  }
  func.func @transform_4(%arg0: i32, %arg1: i32) -> (i32, i32, i32) {
    %c0_i32 = arith.constant 0 : i32
    %c0_i32_0 = arith.constant 0 : i32
    %c0_i32_1 = arith.constant 0 : i32
    %c0_i32_2 = arith.constant 0 : i32
    return %c0_i32, %c0_i32_0, %c0_i32_1 : i32, i32, i32
  }
  func.func @transform_5(%arg0: i32, %arg1: i32) -> (i32, i32, i32) {
    %c0_i32 = arith.constant 0 : i32
    %c0_i32_0 = arith.constant 0 : i32
    %c0_i32_1 = arith.constant 0 : i32
    %c0_i32_2 = arith.constant 0 : i32
    return %c0_i32, %c0_i32_0, %c0_i32_1 : i32, i32, i32
  }
  func.func @transform_6(%arg0: i32, %arg1: i32) -> (i32, i32, i32, i32) {
    %c0_i32 = arith.constant 0 : i32
    %c0_i32_0 = arith.constant 0 : i32
    %c0_i32_1 = arith.constant 0 : i32
    return %arg0, %c0_i32, %arg1, %c0_i32_0 : i32, i32, i32, i32
  }
  func.func @transform_7(%arg0: i32, %arg1: i32) -> (i32, i32, i32, i32) {
    %c0_i32 = arith.constant 0 : i32
    %c0_i32_0 = arith.constant 0 : i32
    %c0_i32_1 = arith.constant 0 : i32
    return %arg0, %c0_i32, %arg1, %c0_i32_0 : i32, i32, i32, i32
  }
  func.func @transform_8(%arg0: i32, %arg1: i32) -> (i32, i32, i32, i32) {
    %c0_i32 = arith.constant 0 : i32
    %c0_i32_0 = arith.constant 0 : i32
    %c0_i32_1 = arith.constant 0 : i32
    return %arg0, %c0_i32, %arg1, %c0_i32_0 : i32, i32, i32, i32
  }
}

</mosaic_0001>

<llo_original>
// kernel: tpu_custom_call.1
$region0: #{tpu_custom_call.1}
  #allocation0 [shape = 'u32[]', space=smem, size = 0x4, offset = 0x4, fixed_abs, tag = 'smem constant byte address 0x4 - core index']
  #allocation1 [shape = 'u32[144,128]{1,0:T(1,128)}', space=vmem, size = 0x12000, scoped, tag = 'internal scratch']
  %s0 = inlined_call_operand.vmem [shape: f32[2,8,32], index: 0, kind: input, shape index: {}]
  %s1 = inlined_call_operand.vmem [shape: f32[1,32], index: 1, kind: input, shape index: {}]
  %s2 = inlined_call_operand.vmem [shape: f32[1,32], index: 2, kind: input, shape index: {}]
  %s3 = inlined_call_operand.vmem [shape: bf16[2,32,16], index: 3, kind: input, shape index: {}]
  %s4 = inlined_call_operand.vmem [shape: bf16[2,32,16], index: 4, kind: input, shape index: {}]
  %s5 = inlined_call_operand.vmem [shape: bf16[2,32,16], index: 5, kind: input, shape index: {}]
  %s6 = inlined_call_operand.hbm [shape: bf16[2,2,8,16], index: 6, kind: output, shape index: {0}]
  %s7 = inlined_call_operand.hbm [shape: bf16[2,2,8,16], index: 7, kind: output, shape index: {1}]
  %s8 = inlined_call_operand.hbm [shape: bf16[2,2,8,16], index: 8, kind: output, shape index: {2}]
  %9 = xla_tuple %s6, %s7, %s8
  %s10 = sld [smem:[#allocation0]]
  $region73: #{tpu_custom_call.1} parent=0
    _
  %s12 = ssub.s32 1, %s10
  %s13 = scalar_select 0, %s12, %s10
  $region1: #{tpu_custom_call.1} parent=0
    #allocation2 [shape = 'u8[8192]{0}', space=vmem, size = 0x2000, scoped, tag = 'output window, operand 0']
    #allocation3 [shape = 's32[2]{0}', space=sflag, size = 0x8, scoped, tag = 'scoped memory for tpu_custom_call.1']
    #allocation4 [shape = 'u8[8192]{0}', space=vmem, size = 0x2000, scoped, tag = 'output window, operand 1']
    #allocation5 [shape = 's32[2]{0}', space=sflag, size = 0x8, scoped, tag = 'scoped memory for tpu_custom_call.1']
    #allocation6 [shape = 'u8[8192]{0}', space=vmem, size = 0x2000, scoped, tag = 'output window, operand 2']
    %14 = vsyncpa [#allocation3], 0
    %s15 = scalar_lea.sflag [#allocation3], 1
    %16 = vsyncpa %s15, 0
    %17 = vsyncpa [#allocation5], 0
    %s18 = scalar_lea.sflag [#allocation5], 1
    %19 = vsyncpa %s18, 0
    loop: start=0, step=1, limit=4
    $region2: #{tpu_custom_call.1} parent=1 // loop_pre_header
      _
    $region3: #{tpu_custom_call.1} parent=1 // loop_header
      %s21 = sphi 0, %s25
      %p22 = scmp.ge.s32.totalorder %s21, 4
      %s28 = sphi 0, %s40
      %s29 = sphi 0, %s36
      %s30 = sphi 0, %s28
      %s31 = sphi 0, %s29
      %s32 = sphi 0, %s30
      %s33 = sphi 0, %s31
      %s45 = sphi 0, %s47
      %s48 = sphi 0, %s45
      %s49 = sphi 0, %s48
      %s65 = sphi 0, %s49
      %s69 = sphi 0, %s69
      %s71 = sphi 0, %s69
      %s72 = sphi 0, %s71
      %s86 = sphi 0, %s72
      %s90 = sphi 0, %s90
      %s92 = sphi 0, %s90
      %s93 = sphi 0, %s92
      %s107 = sphi 0, %s93
      %s111 = sphi 0, %s111
      %s113 = sphi 0, %s111
      %s114 = sphi 0, %s113
      %s128 = sphi 0, %s114
      %s132 = sphi 0, %s132
      %s134 = sphi 0, %s132
      %s135 = sphi 0, %s134
      %s149 = sphi 0, %s135
      %s153 = sphi 0, %s153
      %s155 = sphi 0, %s153
      %s156 = sphi 0, %s155
      %s170 = sphi 0, %s156
      %s178 = sphi 0, %s180
      %s181 = sphi 0, %s178
      %s182 = sphi 0, %s181
      %s198 = sphi 0, %s182
      %s206 = sphi 0, %s208
      %s209 = sphi 0, %s206
      %s210 = sphi 0, %s209
      %s226 = sphi 0, %s210
      %s234 = sphi 0, %s236
      %s237 = sphi 0, %s234
      %s238 = sphi 0, %s237
      %s254 = sphi 0, %s238
    $region4: #{tpu_custom_call.1} parent=1 // loop_header_branch
      %24 = sbr.rel (%p22) target = $region8
    $region5: #{tpu_custom_call.1} parent=1 // loop_body
      %s26 = ssub.s32 %s21, 1
      %s27 = ssub.s32 %s21, 2
      %s34 = sadd.s32 1, %s29
      %p35 = scmp.ge.s32.totalorder %s34, 1
      %s36 = scalar_select %p35, 0, %s34
      %s37 = sadd.s32 1, %s28
      %s38 = scalar_select %p35, %s37, %s28
      %p39 = scmp.ge.s32.totalorder %s38, 2
      %s40 = scalar_select %p39, 0, %s38
      %s41 = ssub.s32 %s28, %s40
      %s42 = ssub.s32 %s29, %s36
      %s43 = sor.u32 %s41, %s42
      %p44 = scmp.eq.s32.totalorder %s43, 0
      %s46 = sadd.s32 %s45, 1
      %s47 = scalar_select %p44, %s45, %s46
      %p50 = pneg %p44
      %p51 = scmp.eq.s32.totalorder %s21, 1
      %p52 = por %p50, %p51
      %p53 = scmp.ne.s32.totalorder %s45, %s48
      %p54 = scmp.eq.s32.totalorder %s21, 0
      %p55 = por %p53, %p54
      %p56 = scmp.ne.s32.totalorder %s45, %s48
      %p57 = scmp.eq.s32.totalorder %s26, 1
      %p58 = por %p56, %p57
      %p59 = scmp.ne.s32.totalorder %s48, %s49
      %p60 = scmp.eq.s32.totalorder %s26, 0
      %p61 = por %p59, %p60
      %p62 = scmp.ne.s32.totalorder %s48, %s49
      %p63 = scmp.eq.s32.totalorder %s27, 1
      %p64 = por %p62, %p63
      %p66 = scmp.ne.s32.totalorder %s49, %s65
      %p67 = scmp.eq.s32.totalorder %s27, 0
      %p68 = por %p66, %p67
      %s70 = sadd.s32 %s69, 1
      %p73 = scmp.eq.s32.totalorder %s21, 1
      %p74 = scmp.ne.s32.totalorder %s69, %s71
      %p75 = scmp.eq.s32.totalorder %s21, 0
      %p76 = por %p74, %p75
      %p77 = scmp.ne.s32.totalorder %s69, %s71
      %p78 = scmp.eq.s32.totalorder %s26, 1
      %p79 = por %p77, %p78
      %p80 = scmp.ne.s32.totalorder %s71, %s72
      %p81 = scmp.eq.s32.totalorder %s26, 0
      %p82 = por %p80, %p81
      %p83 = scmp.ne.s32.totalorder %s71, %s72
      %p84 = scmp.eq.s32.totalorder %s27, 1
      %p85 = por %p83, %p84
      %p87 = scmp.ne.s32.totalorder %s72, %s86
      %p88 = scmp.eq.s32.totalorder %s27, 0
      %p89 = por %p87, %p88
      %s91 = sadd.s32 %s90, 1
      %p94 = scmp.eq.s32.totalorder %s21, 1
      %p95 = scmp.ne.s32.totalorder %s90, %s92
      %p96 = scmp.eq.s32.totalorder %s21, 0
      %p97 = por %p95, %p96
      %p98 = scmp.ne.s32.totalorder %s90, %s92
      %p99 = scmp.eq.s32.totalorder %s26, 1
      %p100 = por %p98, %p99
      %p101 = scmp.ne.s32.totalorder %s92, %s93
      %p102 = scmp.eq.s32.totalorder %s26, 0
      %p103 = por %p101, %p102
      %p104 = scmp.ne.s32.totalorder %s92, %s93
      %p105 = scmp.eq.s32.totalorder %s27, 1
      %p106 = por %p104, %p105
      %p108 = scmp.ne.s32.totalorder %s93, %s107
      %p109 = scmp.eq.s32.totalorder %s27, 0
      %p110 = por %p108, %p109
      %s112 = sadd.s32 %s111, 1
      %p115 = scmp.eq.s32.totalorder %s21, 1
      %p116 = scmp.ne.s32.totalorder %s111, %s113
      %p117 = scmp.eq.s32.totalorder %s21, 0
      %p118 = por %p116, %p117
      %p119 = scmp.ne.s32.totalorder %s111, %s113
      %p120 = scmp.eq.s32.totalorder %s26, 1
      %p121 = por %p119, %p120
      %p122 = scmp.ne.s32.totalorder %s113, %s114
      %p123 = scmp.eq.s32.totalorder %s26, 0
      %p124 = por %p122, %p123
      %p125 = scmp.ne.s32.totalorder %s113, %s114
      %p126 = scmp.eq.s32.totalorder %s27, 1
      %p127 = por %p125, %p126
      %p129 = scmp.ne.s32.totalorder %s114, %s128
      %p130 = scmp.eq.s32.totalorder %s27, 0
      %p131 = por %p129, %p130
      %s133 = sadd.s32 %s132, 1
      %p136 = scmp.eq.s32.totalorder %s21, 1
      %p137 = scmp.ne.s32.totalorder %s132, %s134
      %p138 = scmp.eq.s32.totalorder %s21, 0
      %p139 = por %p137, %p138
      %p140 = scmp.ne.s32.totalorder %s132, %s134
      %p141 = scmp.eq.s32.totalorder %s26, 1
      %p142 = por %p140, %p141
      %p143 = scmp.ne.s32.totalorder %s134, %s135
      %p144 = scmp.eq.s32.totalorder %s26, 0
      %p145 = por %p143, %p144
      %p146 = scmp.ne.s32.totalorder %s134, %s135
      %p147 = scmp.eq.s32.totalorder %s27, 1
      %p148 = por %p146, %p147
      %p150 = scmp.ne.s32.totalorder %s135, %s149
      %p151 = scmp.eq.s32.totalorder %s27, 0
      %p152 = por %p150, %p151
      %s154 = sadd.s32 %s153, 1
      %p157 = scmp.eq.s32.totalorder %s21, 1
      %p158 = scmp.ne.s32.totalorder %s153, %s155
      %p159 = scmp.eq.s32.totalorder %s21, 0
      %p160 = por %p158, %p159
      %p161 = scmp.ne.s32.totalorder %s153, %s155
      %p162 = scmp.eq.s32.totalorder %s26, 1
      %p163 = por %p161, %p162
      %p164 = scmp.ne.s32.totalorder %s155, %s156
      %p165 = scmp.eq.s32.totalorder %s26, 0
      %p166 = por %p164, %p165
      %p167 = scmp.ne.s32.totalorder %s155, %s156
      %p168 = scmp.eq.s32.totalorder %s27, 1
      %p169 = por %p167, %p168
      %p171 = scmp.ne.s32.totalorder %s156, %s170
      %p172 = scmp.eq.s32.totalorder %s27, 0
      %p173 = por %p171, %p172
      %s174 = ssub.s32 %s28, %s40
      %s175 = ssub.s32 %s29, %s36
      %s176 = sor.u32 %s174, %s175
      %p177 = scmp.eq.s32.totalorder %s176, 0
      %s179 = sadd.s32 %s178, 1
      %s180 = scalar_select %p177, %s178, %s179
      %p183 = pneg %p177
      %p184 = scmp.eq.s32.totalorder %s21, 1
      %p185 = por %p183, %p184
      %p186 = scmp.ne.s32.totalorder %s178, %s181
      %p187 = scmp.eq.s32.totalorder %s21, 0
      %p188 = por %p186, %p187
      %p189 = scmp.ne.s32.totalorder %s178, %s181
      %p190 = scmp.eq.s32.totalorder %s26, 1
      %p191 = por %p189, %p190
      %p192 = scmp.ne.s32.totalorder %s181, %s182
      %p193 = scmp.eq.s32.totalorder %s26, 0
      %p194 = por %p192, %p193
      %p195 = scmp.ne.s32.totalorder %s181, %s182
      %p196 = scmp.eq.s32.totalorder %s27, 1
      %p197 = por %p195, %p196
      %p199 = scmp.ne.s32.totalorder %s182, %s198
      %p200 = scmp.eq.s32.totalorder %s27, 0
      %p201 = por %p199, %p200
      %s202 = ssub.s32 %s28, %s40
      %s203 = ssub.s32 %s29, %s36
      %s204 = sor.u32 %s202, %s203
      %p205 = scmp.eq.s32.totalorder %s204, 0
      %s207 = sadd.s32 %s206, 1
      %s208 = scalar_select %p205, %s206, %s207
      %p211 = pneg %p205
      %p212 = scmp.eq.s32.totalorder %s21, 1
      %p213 = por %p211, %p212
      %p214 = scmp.ne.s32.totalorder %s206, %s209
      %p215 = scmp.eq.s32.totalorder %s21, 0
      %p216 = por %p214, %p215
      %p217 = scmp.ne.s32.totalorder %s206, %s209
      %p218 = scmp.eq.s32.totalorder %s26, 1
      %p219 = por %p217, %p218
      %p220 = scmp.ne.s32.totalorder %s209, %s210
      %p221 = scmp.eq.s32.totalorder %s26, 0
      %p222 = por %p220, %p221
      %p223 = scmp.ne.s32.totalorder %s209, %s210
      %p224 = scmp.eq.s32.totalorder %s27, 1
      %p225 = por %p223, %p224
      %p227 = scmp.ne.s32.totalorder %s210, %s226
      %p228 = scmp.eq.s32.totalorder %s27, 0
      %p229 = por %p227, %p228
      %s230 = ssub.s32 %s28, %s40
      %s231 = ssub.s32 %s29, %s36
      %s232 = sor.u32 %s230, %s231
      %p233 = scmp.eq.s32.totalorder %s232, 0
      %s235 = sadd.s32 %s234, 1
      %s236 = scalar_select %p233, %s234, %s235
      %p239 = pneg %p233
      %p240 = scmp.eq.s32.totalorder %s21, 1
      %p241 = por %p239, %p240
      %p242 = scmp.ne.s32.totalorder %s234, %s237
      %p243 = scmp.eq.s32.totalorder %s21, 0
      %p244 = por %p242, %p243
      %p245 = scmp.ne.s32.totalorder %s234, %s237
      %p246 = scmp.eq.s32.totalorder %s26, 1
      %p247 = por %p245, %p246
      %p248 = scmp.ne.s32.totalorder %s237, %s238
      %p249 = scmp.eq.s32.totalorder %s26, 0
      %p250 = por %p248, %p249
      %p251 = scmp.ne.s32.totalorder %s237, %s238
      %p252 = scmp.eq.s32.totalorder %s27, 1
      %p253 = por %p251, %p252
      %p255 = scmp.ne.s32.totalorder %s238, %s254
      %p256 = scmp.eq.s32.totalorder %s27, 0
      %p257 = por %p255, %p256
      %p258 = scmp.le.s32.totalorder 1, %s21
      %p259 = scmp.lt.s32.totalorder %s21, 3
      %p260 = pnand %p258, %p259
      %p261 = pneg %p260
      // Predicated region
      $region9: #{tpu_custom_call.1} parent=5 // pred_check
        _
      $region10: #{tpu_custom_call.1} parent=5 // pred_check_branch
        %263 = sbr.rel (%p260) target = $region12
      $region11: #{tpu_custom_call.1} parent=5 // pred_region
        %s264 = ssub.s32 %s21, 1
        // Predicated region
        $region13: #{tpu_custom_call.1} parent=11 // pred_check
          %p265 = pneg %p82
        $region14: #{tpu_custom_call.1} parent=11 // pred_check_branch
          %267 = sbr.rel (%p265) target = $region16
        $region15: #{tpu_custom_call.1} parent=11 // pred_region
          _
        $region16: #{tpu_custom_call.1} parent=11 // pred_fallthru
          _
        // Predicated region
        $region17: #{tpu_custom_call.1} parent=11 // pred_check
          %p268 = pneg %p103
        $region18: #{tpu_custom_call.1} parent=11 // pred_check_branch
          %270 = sbr.rel (%p268) target = $region20
        $region19: #{tpu_custom_call.1} parent=11 // pred_region
          _
        $region20: #{tpu_custom_call.1} parent=11 // pred_fallthru
          _
        // Predicated region
        $region21: #{tpu_custom_call.1} parent=11 // pred_check
          %p271 = pneg %p124
        $region22: #{tpu_custom_call.1} parent=11 // pred_check_branch
          %273 = sbr.rel (%p271) target = $region24
        $region23: #{tpu_custom_call.1} parent=11 // pred_region
          _
        $region24: #{tpu_custom_call.1} parent=11 // pred_fallthru
          _
        // Predicated region
        $region25: #{tpu_custom_call.1} parent=11 // pred_check
          %p274 = pneg %p145
        $region26: #{tpu_custom_call.1} parent=11 // pred_check_branch
          %276 = sbr.rel (%p274) target = $region28
        $region27: #{tpu_custom_call.1} parent=11 // pred_region
          _
        $region28: #{tpu_custom_call.1} parent=11 // pred_fallthru
          _
        // Predicated region
        $region29: #{tpu_custom_call.1} parent=11 // pred_check
          %p277 = pneg %p166
        $region30: #{tpu_custom_call.1} parent=11 // pred_check_branch
          %279 = sbr.rel (%p277) target = $region32
        $region31: #{tpu_custom_call.1} parent=11 // pred_region
          _
        $region32: #{tpu_custom_call.1} parent=11 // pred_fallthru
          _
      $region12: #{tpu_custom_call.1} parent=5 // pred_fallthru
        _
      %p280 = scmp.lt.s32.totalorder %s21, 2
      // Predicated region
      $region33: #{tpu_custom_call.1} parent=5 // pred_check
        %p281 = pneg %p280
      $region34: #{tpu_custom_call.1} parent=5 // pred_check_branch
        %283 = sbr.rel (%p281) target = $region36
      $region35: #{tpu_custom_call.1} parent=5 // pred_region
        // Predicated region
        $region37: #{tpu_custom_call.1} parent=35 // pred_check
          %p284 = pneg %p55
        $region38: #{tpu_custom_call.1} parent=35 // pred_check_branch
          %286 = sbr.rel (%p284) target = $region40
        $region39: #{tpu_custom_call.1} parent=35 // pred_region
          %p287 = scmp.lt.s32.totalorder %s28, 1
          %s288 = scalar_select %p287, %s28, 1
          %p289 = scmp.lt.s32.totalorder %s29, 0
          %s290 = scalar_select %p289, %s29, 0
          %s291 = sadd.s32 %s290, %s288
          %s292 = smul.addr %s291, 8
          %s293 = scalar_lea.vmem %s0, %s292
        $region40: #{tpu_custom_call.1} parent=35 // pred_fallthru
          _
      $region36: #{tpu_custom_call.1} parent=5 // pred_fallthru
        _
      %p294 = scmp.le.s32.totalorder 1, %s21
      %p295 = scmp.lt.s32.totalorder %s21, 3
      %p296 = pnand %p294, %p295
      %p297 = pneg %p296
      // Predicated region
      $region41: #{tpu_custom_call.1} parent=5 // pred_check
        _
      $region42: #{tpu_custom_call.1} parent=5 // pred_check_branch
        %299 = sbr.rel (%p296) target = $region44
      $region43: #{tpu_custom_call.1} parent=5 // pred_region
        %s300 = ssub.s32 %s21, 1
        %p301 = scmp.lt.s32.totalorder %s30, 1
        %s302 = scalar_select %p301, %s30, 1
        %p303 = scmp.lt.s32.totalorder %s31, 0
        %s304 = scalar_select %p303, %s31, 0
        %s305 = sadd.s32 %s304, %s302
        %s306 = smul.addr %s305, 8
        %s307 = scalar_lea.vmem %s0, %s306
        %p308 = pneg %p61
        %p309 = pneg %p58
        %p310 = pneg %p82
        %p311 = pneg %p79
        %p312 = pneg %p103
        %p313 = pneg %p100
        %p314 = pneg %p124
        %p315 = pneg %p121
        %p316 = pneg %p145
        %p317 = pneg %p142
        %p318 = pneg %p166
        %p319 = pneg %p163
        %p320 = pneg %p194
        %p321 = pneg %p191
        %s322 = sand.u32 %s181, 1
        %s323 = scalar_lea.sflag [#allocation3], %s322
        %s324 = sand.u32 %s181, 1
        %s325 = smul.addr %s324, 8
        %s326 = scalar_lea.vmem [#allocation2], %s325
        %p327 = pneg %p222
        %p328 = pneg %p219
        %s329 = sand.u32 %s26, 1
        %s330 = scalar_lea.sflag [#allocation5], %s329
        %s331 = sand.u32 %s209, 1
        %s332 = smul.addr %s331, 8
        %s333 = scalar_lea.vmem [#allocation4], %s332
        %p334 = pneg %p250
        %p335 = pneg %p247
        %s336 = sand.u32 %s26, 1
        %s337 = scalar_lea.sflag [#allocation5], %s336
        %s338 = sand.u32 %s237, 1
        %s339 = smul.addr %s338, 8
        %s340 = scalar_lea.vmem [#allocation6], %s339
        %p341 = scmp.lt.s32.totalorder %s30, 1
        %s342 = scalar_select %p341, %s30, 1
        %p343 = scmp.lt.s32.totalorder %s31, 0
        %s344 = scalar_select %p343, %s31, 0
        %s345 = sadd.s32 %s344, %s342
        %s346 = smul.addr %s345, 8
        %s347 = scalar_lea.vmem %s0, %s346
        %v349 = vld [vmem:[%s347] sm:$0xff]
        %vm350 = vcmask 261120
        %v351 = vsel %vm350, %v349, 0.0
        %352 = vadd.xlane.f32.xlu0 %v351
        %v353 = vpop.xlane.xlu0 %352
        %v354 = vrcp.pop 32.0
        %v355 = vmul.f32 %v353, %v354
        %v356 = vsub.f32 %v349, %v355
        %v357 = vmul.f32 %v356, %v356
        %v358 = vsel %vm350, %v357, 0.0
        %359 = vadd.xlane.f32.xlu0 %v358
        %v360 = vpop.xlane.xlu0 %359
        %v361 = vmul.f32 %v360, %v354
        %v362 = vadd.f32 %v361, 1e-05
        %v363 = vrsqrt.pop %v362
        %v364 = vmul.f32 %v356, %v363
        %v365 = vld [vmem:[%s1] sm:$0x1]
        %v367 = vlaneseq
        %v368 = vshrl.u32 %v367, 7
        %v369 = vsub.s32 0, %v368
        %v370 = vrot.slane %v365, %v369
        %v372 = vmul.f32 %v364, %v370
        %v373 = vld [vmem:[%s2] sm:$0x1]
        %v375 = vlaneseq
        %v376 = vshrl.u32 %v375, 7
        %v377 = vsub.s32 0, %v376
        %v378 = vrot.slane %v373, %v377
        %v380 = vadd.f32 %v372, %v378
        %v381 = vpack.c.bf16 %v380, %v380
        %v382 = vld [vmem:[%s3] sm:$0xf]
        %v383 = vld [vmem:[%s3 + $0x4] sm:$0xf]
        %v384 = vld [vmem:[%s3 + $0x8] sm:$0xf]
        %v385 = vld [vmem:[%s3 + $0xc] sm:$0xf]
        %v390 = vunpack.c.l.b16 %v382
        %v391 = vunpack.c.l.b16 %v383
        %v392 = vunpack.c.l.b16 %v384
        %v393 = vunpack.c.l.b16 %v385
        %v394 = vpack.c.b16 %v391, %v390
        %v395 = vpack.c.b16 %v393, %v392
        %v399 = vsel %vm350, %v381, 0
        %401 = vmatprep.subr.bf16.mxu0 0
        %402 = vmatpush1.bf16.msra.mxu0 %v394
        %403 = vmatprep.subr.bf16.mxu0 0
        %404 = vmatpush1.bf16.msra.mxu0 %v395
        %405 = vmatprep.subr.bf16.mxu0 0
        %406 = vmatpush1.bf16.msra.mxu0 0
        %407 = vmatprep.subr.bf16.mxu0 0
        %408 = vmatpush1.bf16.msra.mxu0 0
        %409 = vmatprep.subr.bf16.mxu0 0
        %410 = vmatpush1.bf16.msra.mxu0 0
        %411 = vmatprep.subr.bf16.mxu0 0
        %412 = vmatpush1.bf16.msra.mxu0 0
        %413 = vmatprep.subr.bf16.mxu0 0
        %414 = vmatpush1.bf16.msra.mxu0 0
        %415 = vmatprep.subr.bf16.mxu0 0
        %416 = vmatpush1.bf16.msra.mxu0 0
        %417 = vmatprep.subr.bf16.mxu0 0
        %418 = vmatpush1.bf16.msra.mxu0 0
        %419 = vmatprep.subr.bf16.mxu0 0
        %420 = vmatpush1.bf16.msra.mxu0 0
        %421 = vmatprep.subr.bf16.mxu0 0
        %422 = vmatpush1.bf16.msra.mxu0 0
        %423 = vmatprep.subr.bf16.mxu0 0
        %424 = vmatpush1.bf16.msra.mxu0 0
        %425 = vmatprep.subr.bf16.mxu0 0
        %426 = vmatpush1.bf16.msra.mxu0 0
        %427 = vmatprep.subr.bf16.mxu0 0
        %428 = vmatpush1.bf16.msra.mxu0 0
        %429 = vmatprep.subr.bf16.mxu0 0
        %430 = vmatpush1.bf16.msra.mxu0 0
        %431 = vmatprep.subr.bf16.mxu0 0
        %432 = vmatpush1.bf16.msra.mxu0 0
        %433 = vmatprep.mubr.bf16.mxu0 0
        %434 = vmatmul.mubr.bf16.gmra.mrb[0].mxu0 %v399
        %v435 = vpop.f32.mrb[0].mxu0
        %v436 = vadd.f32 0.0, %v435
        %v437 = vpop.f32.mrb[0].mxu0
        %v438 = vpop.f32.mrb[0].mxu0
        %v439 = vpop.f32.mrb[0].mxu0
        %440 = vdwg.mxu0
        %v441 = vpack.c.bf16 %v436, %v436
        %vm442 = vcmask 125952
        %443 = vst.msk [vmem:[%s326] sm:$0xf] %vm442, %v441
        %v444 = vld [vmem:[%s4] sm:$0xf]
        %v445 = vld [vmem:[%s4 + $0x4] sm:$0xf]
        %v446 = vld [vmem:[%s4 + $0x8] sm:$0xf]
        %v447 = vld [vmem:[%s4 + $0xc] sm:$0xf]
        %v452 = vunpack.c.l.b16 %v444
        %v453 = vunpack.c.l.b16 %v445
        %v454 = vunpack.c.l.b16 %v446
        %v455 = vunpack.c.l.b16 %v447
        %v456 = vpack.c.b16 %v453, %v452
        %v457 = vpack.c.b16 %v455, %v454
        %460 = vmatprep.subr.bf16.mxu0 0
        %461 = vmatpush1.bf16.msra.mxu0 %v456
        %462 = vmatprep.subr.bf16.mxu0 0
        %463 = vmatpush1.bf16.msra.mxu0 %v457
        %464 = vmatprep.subr.bf16.mxu0 0
        %465 = vmatpush1.bf16.msra.mxu0 0
        %466 = vmatprep.subr.bf16.mxu0 0
        %467 = vmatpush1.bf16.msra.mxu0 0
        %468 = vmatprep.subr.bf16.mxu0 0
        %469 = vmatpush1.bf16.msra.mxu0 0
        %470 = vmatprep.subr.bf16.mxu0 0
        %471 = vmatpush1.bf16.msra.mxu0 0
        %472 = vmatprep.subr.bf16.mxu0 0
        %473 = vmatpush1.bf16.msra.mxu0 0
        %474 = vmatprep.subr.bf16.mxu0 0
        %475 = vmatpush1.bf16.msra.mxu0 0
        %476 = vmatprep.subr.bf16.mxu0 0
        %477 = vmatpush1.bf16.msra.mxu0 0
        %478 = vmatprep.subr.bf16.mxu0 0
        %479 = vmatpush1.bf16.msra.mxu0 0
        %480 = vmatprep.subr.bf16.mxu0 0
        %481 = vmatpush1.bf16.msra.mxu0 0
        %482 = vmatprep.subr.bf16.mxu0 0
        %483 = vmatpush1.bf16.msra.mxu0 0
        %484 = vmatprep.subr.bf16.mxu0 0
        %485 = vmatpush1.bf16.msra.mxu0 0
        %486 = vmatprep.subr.bf16.mxu0 0
        %487 = vmatpush1.bf16.msra.mxu0 0
        %488 = vmatprep.subr.bf16.mxu0 0
        %489 = vmatpush1.bf16.msra.mxu0 0
        %490 = vmatprep.subr.bf16.mxu0 0
        %491 = vmatpush1.bf16.msra.mxu0 0
        %492 = vmatprep.mubr.bf16.mxu0 0
        %493 = vmatmul.mubr.bf16.gmra.mrb[0].mxu0 %v399
        %v494 = vpop.f32.mrb[0].mxu0
        %v495 = vadd.f32 0.0, %v494
        %v496 = vpop.f32.mrb[0].mxu0
        %v497 = vpop.f32.mrb[0].mxu0
        %v498 = vpop.f32.mrb[0].mxu0
        %499 = vdwg.mxu0
        %v500 = vpack.c.bf16 %v495, %v495
        %501 = vst.msk [vmem:[%s333] sm:$0xf] %vm442, %v500
        %v502 = vld [vmem:[%s5] sm:$0xf]
        %v503 = vld [vmem:[%s5 + $0x4] sm:$0xf]
        %v504 = vld [vmem:[%s5 + $0x8] sm:$0xf]
        %v505 = vld [vmem:[%s5 + $0xc] sm:$0xf]
        %v510 = vunpack.c.l.b16 %v502
        %v511 = vunpack.c.l.b16 %v503
        %v512 = vunpack.c.l.b16 %v504
        %v513 = vunpack.c.l.b16 %v505
        %v514 = vpack.c.b16 %v511, %v510
        %v515 = vpack.c.b16 %v513, %v512
        %518 = vmatprep.subr.bf16.mxu0 0
        %519 = vmatpush1.bf16.msra.mxu0 %v514
        %520 = vmatprep.subr.bf16.mxu0 0
        %521 = vmatpush1.bf16.msra.mxu0 %v515
        %522 = vmatprep.subr.bf16.mxu0 0
        %523 = vmatpush1.bf16.msra.mxu0 0
        %524 = vmatprep.subr.bf16.mxu0 0
        %525 = vmatpush1.bf16.msra.mxu0 0
        %526 = vmatprep.subr.bf16.mxu0 0
        %527 = vmatpush1.bf16.msra.mxu0 0
        %528 = vmatprep.subr.bf16.mxu0 0
        %529 = vmatpush1.bf16.msra.mxu0 0
        %530 = vmatprep.subr.bf16.mxu0 0
        %531 = vmatpush1.bf16.msra.mxu0 0
        %532 = vmatprep.subr.bf16.mxu0 0
        %533 = vmatpush1.bf16.msra.mxu0 0
        %534 = vmatprep.subr.bf16.mxu0 0
        %535 = vmatpush1.bf16.msra.mxu0 0
        %536 = vmatprep.subr.bf16.mxu0 0
        %537 = vmatpush1.bf16.msra.mxu0 0
        %538 = vmatprep.subr.bf16.mxu0 0
        %539 = vmatpush1.bf16.msra.mxu0 0
        %540 = vmatprep.subr.bf16.mxu0 0
        %541 = vmatpush1.bf16.msra.mxu0 0
        %542 = vmatprep.subr.bf16.mxu0 0
        %543 = vmatpush1.bf16.msra.mxu0 0
        %544 = vmatprep.subr.bf16.mxu0 0
        %545 = vmatpush1.bf16.msra.mxu0 0
        %546 = vmatprep.subr.bf16.mxu0 0
        %547 = vmatpush1.bf16.msra.mxu0 0
        %548 = vmatprep.subr.bf16.mxu0 0
        %549 = vmatpush1.bf16.msra.mxu0 0
        %550 = vmatprep.mubr.bf16.mxu0 0
        %551 = vmatmul.mubr.bf16.gmra.mrb[0].mxu0 %v399
        %v552 = vpop.f32.mrb[0].mxu0
        %v553 = vadd.f32 0.0, %v552
        %v554 = vpop.f32.mrb[0].mxu0
        %v555 = vpop.f32.mrb[0].mxu0
        %v556 = vpop.f32.mrb[0].mxu0
        %557 = vdwg.mxu0
        %v558 = vpack.c.bf16 %v553, %v553
        %559 = vst.msk [vmem:[%s340] sm:$0xf] %vm442, %v558
        %s560 = scalar_lea.vmem %s3, 16
        %v561 = vld [vmem:[%s560] sm:$0xf]
        %v562 = vld [vmem:[%s560 + $0x4] sm:$0xf]
        %v563 = vld [vmem:[%s560 + $0x8] sm:$0xf]
        %v564 = vld [vmem:[%s560 + $0xc] sm:$0xf]
        %v569 = vunpack.c.l.b16 %v561
        %v570 = vunpack.c.l.b16 %v562
        %v571 = vunpack.c.l.b16 %v563
        %v572 = vunpack.c.l.b16 %v564
        %v573 = vpack.c.b16 %v570, %v569
        %v574 = vpack.c.b16 %v572, %v571
        %577 = vmatprep.subr.bf16.mxu0 0
        %578 = vmatpush1.bf16.msra.mxu0 %v573
        %579 = vmatprep.subr.bf16.mxu0 0
        %580 = vmatpush1.bf16.msra.mxu0 %v574
        %581 = vmatprep.subr.bf16.mxu0 0
        %582 = vmatpush1.bf16.msra.mxu0 0
        %583 = vmatprep.subr.bf16.mxu0 0
        %584 = vmatpush1.bf16.msra.mxu0 0
        %585 = vmatprep.subr.bf16.mxu0 0
        %586 = vmatpush1.bf16.msra.mxu0 0
        %587 = vmatprep.subr.bf16.mxu0 0
        %588 = vmatpush1.bf16.msra.mxu0 0
        %589 = vmatprep.subr.bf16.mxu0 0
        %590 = vmatpush1.bf16.msra.mxu0 0
        %591 = vmatprep.subr.bf16.mxu0 0
        %592 = vmatpush1.bf16.msra.mxu0 0
        %593 = vmatprep.subr.bf16.mxu0 0
        %594 = vmatpush1.bf16.msra.mxu0 0
        %595 = vmatprep.subr.bf16.mxu0 0
        %596 = vmatpush1.bf16.msra.mxu0 0
        %597 = vmatprep.subr.bf16.mxu0 0
        %598 = vmatpush1.bf16.msra.mxu0 0
        %599 = vmatprep.subr.bf16.mxu0 0
        %600 = vmatpush1.bf16.msra.mxu0 0
        %601 = vmatprep.subr.bf16.mxu0 0
        %602 = vmatpush1.bf16.msra.mxu0 0
        %603 = vmatprep.subr.bf16.mxu0 0
        %604 = vmatpush1.bf16.msra.mxu0 0
        %605 = vmatprep.subr.bf16.mxu0 0
        %606 = vmatpush1.bf16.msra.mxu0 0
        %607 = vmatprep.subr.bf16.mxu0 0
        %608 = vmatpush1.bf16.msra.mxu0 0
        %609 = vmatprep.mubr.bf16.mxu0 0
        %610 = vmatmul.mubr.bf16.gmra.mrb[0].mxu0 %v399
        %v611 = vpop.f32.mrb[0].mxu0
        %v612 = vadd.f32 0.0, %v611
        %v613 = vpop.f32.mrb[0].mxu0
        %v614 = vpop.f32.mrb[0].mxu0
        %v615 = vpop.f32.mrb[0].mxu0
        %616 = vdwg.mxu0
        %v617 = vpack.c.bf16 %v612, %v612
        %s618 = scalar_lea.vmem %s326, 4 [#allocation2]
        %619 = vst.msk [vmem:[%s618] sm:$0xf] %vm442, %v617
        %s620 = scalar_lea.vmem %s4, 16
        %v621 = vld [vmem:[%s620] sm:$0xf]
        %v622 = vld [vmem:[%s620 + $0x4] sm:$0xf]
        %v623 = vld [vmem:[%s620 + $0x8] sm:$0xf]
        %v624 = vld [vmem:[%s620 + $0xc] sm:$0xf]
        %v629 = vunpack.c.l.b16 %v621
        %v630 = vunpack.c.l.b16 %v622
        %v631 = vunpack.c.l.b16 %v623
        %v632 = vunpack.c.l.b16 %v624
        %v633 = vpack.c.b16 %v630, %v629
        %v634 = vpack.c.b16 %v632, %v631
        %637 = vmatprep.subr.bf16.mxu0 0
        %638 = vmatpush1.bf16.msra.mxu0 %v633
        %639 = vmatprep.subr.bf16.mxu0 0
        %640 = vmatpush1.bf16.msra.mxu0 %v634
        %641 = vmatprep.subr.bf16.mxu0 0
        %642 = vmatpush1.bf16.msra.mxu0 0
        %643 = vmatprep.subr.bf16.mxu0 0
        %644 = vmatpush1.bf16.msra.mxu0 0
        %645 = vmatprep.subr.bf16.mxu0 0
        %646 = vmatpush1.bf16.msra.mxu0 0
        %647 = vmatprep.subr.bf16.mxu0 0
        %648 = vmatpush1.bf16.msra.mxu0 0
        %649 = vmatprep.subr.bf16.mxu0 0
        %650 = vmatpush1.bf16.msra.mxu0 0
        %651 = vmatprep.subr.bf16.mxu0 0
        %652 = vmatpush1.bf16.msra.mxu0 0
        %653 = vmatprep.subr.bf16.mxu0 0
        %654 = vmatpush1.bf16.msra.mxu0 0
        %655 = vmatprep.subr.bf16.mxu0 0
        %656 = vmatpush1.bf16.msra.mxu0 0
        %657 = vmatprep.subr.bf16.mxu0 0
        %658 = vmatpush1.bf16.msra.mxu0 0
        %659 = vmatprep.subr.bf16.mxu0 0
        %660 = vmatpush1.bf16.msra.mxu0 0
        %661 = vmatprep.subr.bf16.mxu0 0
        %662 = vmatpush1.bf16.msra.mxu0 0
        %663 = vmatprep.subr.bf16.mxu0 0
        %664 = vmatpush1.bf16.msra.mxu0 0
        %665 = vmatprep.subr.bf16.mxu0 0
        %666 = vmatpush1.bf16.msra.mxu0 0
        %667 = vmatprep.subr.bf16.mxu0 0
        %668 = vmatpush1.bf16.msra.mxu0 0
        %669 = vmatprep.mubr.bf16.mxu0 0
        %670 = vmatmul.mubr.bf16.gmra.mrb[0].mxu0 %v399
        %v671 = vpop.f32.mrb[0].mxu0
        %v672 = vadd.f32 0.0, %v671
        %v673 = vpop.f32.mrb[0].mxu0
        %v674 = vpop.f32.mrb[0].mxu0
        %v675 = vpop.f32.mrb[0].mxu0
        %676 = vdwg.mxu0
        %v677 = vpack.c.bf16 %v672, %v672
        %s678 = scalar_lea.vmem %s333, 4 [#allocation4]
        %679 = vst.msk [vmem:[%s678] sm:$0xf] %vm442, %v677
        %s680 = scalar_lea.vmem %s5, 16
        %v681 = vld [vmem:[%s680] sm:$0xf]
        %v682 = vld [vmem:[%s680 + $0x4] sm:$0xf]
        %v683 = vld [vmem:[%s680 + $0x8] sm:$0xf]
        %v684 = vld [vmem:[%s680 + $0xc] sm:$0xf]
        %v689 = vunpack.c.l.b16 %v681
        %v690 = vunpack.c.l.b16 %v682
        %v691 = vunpack.c.l.b16 %v683
        %v692 = vunpack.c.l.b16 %v684
        %v693 = vpack.c.b16 %v690, %v689
        %v694 = vpack.c.b16 %v692, %v691
        %697 = vmatprep.subr.bf16.mxu0 0
        %698 = vmatpush1.bf16.msra.mxu0 %v693
        %699 = vmatprep.subr.bf16.mxu0 0
        %700 = vmatpush1.bf16.msra.mxu0 %v694
        %701 = vmatprep.subr.bf16.mxu0 0
        %702 = vmatpush1.bf16.msra.mxu0 0
        %703 = vmatprep.subr.bf16.mxu0 0
        %704 = vmatpush1.bf16.msra.mxu0 0
        %705 = vmatprep.subr.bf16.mxu0 0
        %706 = vmatpush1.bf16.msra.mxu0 0
        %707 = vmatprep.subr.bf16.mxu0 0
        %708 = vmatpush1.bf16.msra.mxu0 0
        %709 = vmatprep.subr.bf16.mxu0 0
        %710 = vmatpush1.bf16.msra.mxu0 0
        %711 = vmatprep.subr.bf16.mxu0 0
        %712 = vmatpush1.bf16.msra.mxu0 0
        %713 = vmatprep.subr.bf16.mxu0 0
        %714 = vmatpush1.bf16.msra.mxu0 0
        %715 = vmatprep.subr.bf16.mxu0 0
        %716 = vmatpush1.bf16.msra.mxu0 0
        %717 = vmatprep.subr.bf16.mxu0 0
        %718 = vmatpush1.bf16.msra.mxu0 0
        %719 = vmatprep.subr.bf16.mxu0 0
        %720 = vmatpush1.bf16.msra.mxu0 0
        %721 = vmatprep.subr.bf16.mxu0 0
        %722 = vmatpush1.bf16.msra.mxu0 0
        %723 = vmatprep.subr.bf16.mxu0 0
        %724 = vmatpush1.bf16.msra.mxu0 0
        %725 = vmatprep.subr.bf16.mxu0 0
        %726 = vmatpush1.bf16.msra.mxu0 0
        %727 = vmatprep.subr.bf16.mxu0 0
        %728 = vmatpush1.bf16.msra.mxu0 0
        %729 = vmatprep.mubr.bf16.mxu0 0
        %730 = vmatmul.mubr.bf16.gmra.mrb[0].mxu0 %v399
        %v731 = vpop.f32.mrb[0].mxu0
        %v732 = vadd.f32 0.0, %v731
        %v733 = vpop.f32.mrb[0].mxu0
        %v734 = vpop.f32.mrb[0].mxu0
        %v735 = vpop.f32.mrb[0].mxu0
        %736 = vdwg.mxu0
        %v737 = vpack.c.bf16 %v732, %v732
        %s738 = scalar_lea.vmem %s340, 4 [#allocation6]
        %739 = vst.msk [vmem:[%s738] sm:$0xf] %vm442, %v737
        %s740 = sand.u32 %s181, 1
        %s741 = scalar_lea.sflag [#allocation3], %s740
        %s742 = sand.u32 %s181, 1
        %s743 = smul.addr %s742, 8
        %s744 = scalar_lea.vmem [#allocation2], %s743
        %s745 = sand.u32 %s26, 1
        %s746 = scalar_lea.sflag [#allocation5], %s745
        %s747 = sand.u32 %s209, 1
        %s748 = smul.addr %s747, 8
        %s749 = scalar_lea.vmem [#allocation4], %s748
        %s750 = sand.u32 %s26, 1
        %s751 = scalar_lea.sflag [#allocation5], %s750
        %s752 = sand.u32 %s237, 1
        %s753 = smul.addr %s752, 8
        %s754 = scalar_lea.vmem [#allocation6], %s753
        // Predicated region
        $region45: #{tpu_custom_call.1} parent=43 // pred_check
          %p755 = pneg %p191
        $region46: #{tpu_custom_call.1} parent=43 // pred_check_branch
          %757 = sbr.rel (%p755) target = $region48
        $region47: #{tpu_custom_call.1} parent=43 // pred_region
          %s759 = ssub.s32 128, 128
          %760 = vsyncadd %s741, %s759
          %s761 = smul.addr %s30, 2
          %s762 = sadd.s32 %s31, %s761
          %s763 = smul.addr %s762, 64
          %s764 = scalar_lea.hbm %s6, %s763
          %s765 = sshll.u32 %s744, 4
          %s766 = int_to_ptr.vmem [resolvable:$true] %s765
          %771 = dma.vmem_to_hbm [thread:$0]  %s766, 128, %s764, %s741, 64, 64, 4
        $region48: #{tpu_custom_call.1} parent=43 // pred_fallthru
          _
        // Predicated region
        $region49: #{tpu_custom_call.1} parent=43 // pred_check
          %p772 = pneg %p219
        $region50: #{tpu_custom_call.1} parent=43 // pred_check_branch
          %774 = sbr.rel (%p772) target = $region52
        $region51: #{tpu_custom_call.1} parent=43 // pred_region
          %s776 = ssub.s32 128, 128
          %777 = vsyncadd %s746, %s776
          %s778 = smul.addr %s30, 2
          %s779 = sadd.s32 %s31, %s778
          %s780 = smul.addr %s779, 64
          %s781 = scalar_lea.hbm %s7, %s780
          %s782 = sshll.u32 %s749, 4
          %s783 = int_to_ptr.vmem [resolvable:$true] %s782
          %788 = dma.vmem_to_hbm [thread:$0]  %s783, 128, %s781, %s746, 64, 64, 4
        $region52: #{tpu_custom_call.1} parent=43 // pred_fallthru
          _
        // Predicated region
        $region53: #{tpu_custom_call.1} parent=43 // pred_check
          %p789 = pneg %p247
        $region54: #{tpu_custom_call.1} parent=43 // pred_check_branch
          %791 = sbr.rel (%p789) target = $region56
        $region55: #{tpu_custom_call.1} parent=43 // pred_region
          %s793 = ssub.s32 128, 128
          %794 = vsyncadd %s751, %s793
          %s795 = smul.addr %s30, 2
          %s796 = sadd.s32 %s31, %s795
          %s797 = smul.addr %s796, 64
          %s798 = scalar_lea.hbm %s8, %s797
          %s799 = sshll.u32 %s754, 4
          %s800 = int_to_ptr.vmem [resolvable:$true] %s799
          %805 = dma.vmem_to_hbm [thread:$0]  %s800, 128, %s798, %s751, 64, 64, 4
        $region56: #{tpu_custom_call.1} parent=43 // pred_fallthru
          _
      $region44: #{tpu_custom_call.1} parent=5 // pred_fallthru
        _
      %p806 = scmp.le.s32.totalorder 2, %s21
      // Predicated region
      $region57: #{tpu_custom_call.1} parent=5 // pred_check
        %p807 = pneg %p806
      $region58: #{tpu_custom_call.1} parent=5 // pred_check_branch
        %809 = sbr.rel (%p807) target = $region60
      $region59: #{tpu_custom_call.1} parent=5 // pred_region
        %s810 = ssub.s32 %s21, 2
        // Predicated region
        $region61: #{tpu_custom_call.1} parent=59 // pred_check
          %p811 = pneg %p197
        $region62: #{tpu_custom_call.1} parent=59 // pred_check_branch
          %813 = sbr.rel (%p811) target = $region64
        $region63: #{tpu_custom_call.1} parent=59 // pred_region
          %s814 = sand.u32 %s182, 1
          %s815 = scalar_lea.sflag [#allocation3], %s814
          %s816 = sand.u32 %s182, 1
          %s817 = smul.addr %s816, 8
          %s818 = scalar_lea.vmem [#allocation2], %s817
          %819 = dma.done %s815, 128
        $region64: #{tpu_custom_call.1} parent=59 // pred_fallthru
          _
        // Predicated region
        $region65: #{tpu_custom_call.1} parent=59 // pred_check
          %p820 = pneg %p225
        $region66: #{tpu_custom_call.1} parent=59 // pred_check_branch
          %822 = sbr.rel (%p820) target = $region68
        $region67: #{tpu_custom_call.1} parent=59 // pred_region
          %s823 = sand.u32 %s27, 1
          %s824 = scalar_lea.sflag [#allocation5], %s823
          %s825 = sand.u32 %s210, 1
          %s826 = smul.addr %s825, 8
          %s827 = scalar_lea.vmem [#allocation4], %s826
          %828 = dma.done %s824, 128
        $region68: #{tpu_custom_call.1} parent=59 // pred_fallthru
          _
        // Predicated region
        $region69: #{tpu_custom_call.1} parent=59 // pred_check
          %p829 = pneg %p253
        $region70: #{tpu_custom_call.1} parent=59 // pred_check_branch
          %831 = sbr.rel (%p829) target = $region72
        $region71: #{tpu_custom_call.1} parent=59 // pred_region
          %s832 = sand.u32 %s27, 1
          %s833 = scalar_lea.sflag [#allocation5], %s832
          %s834 = sand.u32 %s238, 1
          %s835 = smul.addr %s834, 8
          %s836 = scalar_lea.vmem [#allocation6], %s835
          %837 = dma.done %s833, 128
        $region72: #{tpu_custom_call.1} parent=59 // pred_fallthru
          _
      $region60: #{tpu_custom_call.1} parent=5 // pred_fallthru
        _
    $region6: #{tpu_custom_call.1} parent=1 // loop_footer
      %s25 = sadd.s32 1, %s21
    $region7: #{tpu_custom_call.1} parent=1 // loop_footer_branch
      %20 = sbr.rel target = $region3
    $region8: #{tpu_custom_call.1} parent=1 // loop_exit
      _
    %838 = vsyncpa [#allocation3], 1
    %s839 = scalar_lea.sflag [#allocation3], 1
    %840 = vsyncpa %s839, 1
    %841 = vsyncpa [#allocation5], 1
    %s842 = scalar_lea.sflag [#allocation5], 1
    %843 = vsyncpa %s842, 1

</llo_original>
